<compile_context>
chip_gen: v7x
topology: tpu7x:2x2x1
jax: 0.10.0
libtpu: 0.0.40
codegen_flags: <defaults>
</compile_context>

<pallas_src>
import functools

import jax
import jax.numpy as jnp
from jax.experimental import pallas as pl
from jax.experimental.pallas import tpu as pltpu


# ---------------------------------------------------------------------------
# Kernel
# ---------------------------------------------------------------------------

def _sq_dist(x_ref, y_ref):
    """sum((x - y)^2) over the feature (lane) dim -> (tb, 1) float32."""
    tb, d = x_ref.shape
    if d > 128 and d % 128 == 0:
        # Accumulate elementwise partials per 128-lane chunk; one lane reduce.
        part = jnp.zeros((tb, 128), jnp.float32)
        for c in range(d // 128):
            sl = pl.ds(c * 128, 128)
            diff = (x_ref[:, sl].astype(jnp.float32)
                    - y_ref[:, sl].astype(jnp.float32))
            part = part + diff * diff
        return jnp.sum(part, axis=1, keepdims=True)
    diff = x_ref[...].astype(jnp.float32) - y_ref[...].astype(jnp.float32)
    return jnp.sum(diff * diff, axis=1, keepdims=True)


def _triplet_kernel(a_ref, p_ref, n_ref, out_ref, *, margin, total_batch, tb):
    i = pl.program_id(0)

    dp = _sq_dist(a_ref, p_ref)                       # (tb, 1) f32
    dn = _sq_dist(a_ref, n_ref)                       # (tb, 1) f32
    losses = jnp.maximum(dp - dn + jnp.float32(margin), 0.0)

    # Mask rows past the true batch (ragged last tile reads padded garbage).
    row = i * tb + jax.lax.broadcasted_iota(jnp.int32, (tb, 1), 0)
    out_ref[...] = jnp.where(row < total_batch, losses, 0.0)


# ---------------------------------------------------------------------------
# Tile / VMEM sizing (generation-aware)
# ---------------------------------------------------------------------------

def _vmem_capacity_bytes():
    try:
        return int(pltpu.get_tpu_info().vmem_capacity_bytes)
    except Exception:
        return 64 * 1024 * 1024  # conservative default (v7x per-core VMEM)


def _pick_tb(batch, d, itemsize, vmem):
    # 3 inputs x 2 pipeline buffers per input must fit; keep ~1/3 headroom.
    budget = (vmem * 2) // 3
    per_row = 3 * 2 * d * itemsize
    tb = budget // max(per_row, 1)
    tb = int(max(8, min(tb, 4096)))
    tb = (tb // 8) * 8
    b_pad = -(-batch // 8) * 8
    return max(8, min(tb, b_pad))


def _vmem_limit_bytes(tb, d, itemsize, vmem):
    need = 3 * 2 * tb * d * itemsize + 4 * tb * 4 + (2 << 20)
    return int(min(int(vmem * 0.85), max(need, 32 << 20)))


# ---------------------------------------------------------------------------
# Wrapper
# ---------------------------------------------------------------------------

def triplet_loss(anchor, positive, negative, *, margin, size_average=True,
                 tb=None):
    """Pallas TPU implementation of TripletLoss.forward. Returns a scalar."""
    B, D = anchor.shape
    assert positive.shape == (B, D) and negative.shape == (B, D)

    itemsize = jnp.dtype(anchor.dtype).itemsize
    vmem = _vmem_capacity_bytes()
    if tb is None:
        tb = _pick_tb(B, D, itemsize, vmem)
    tb = max(8, (int(tb) // 8) * 8)

    num_tiles = -(-B // tb)          # cdiv; ragged tail masked in-kernel
    b_pad = num_tiles * tb           # padded output rows (always in-bounds)

    kernel = functools.partial(
        _triplet_kernel,
        margin=float(margin),
        total_batch=B,
        tb=tb,
    )

    in_spec = pl.BlockSpec((tb, D), lambda i: (i, 0))

    losses = pl.pallas_call(
        kernel,
        out_shape=jax.ShapeDtypeStruct((b_pad, 1), jnp.float32),
        grid_spec=pltpu.PrefetchScalarGridSpec(
            num_scalar_prefetch=0,
            grid=(num_tiles,),
            in_specs=[in_spec, in_spec, in_spec],
            out_specs=pl.BlockSpec((tb, 1), lambda i: (i, 0)),
        ),
        compiler_params=pltpu.CompilerParams(
            # Tiles are independent -> megacore sharding on v7x.
            dimension_semantics=("parallel",),
            vmem_limit_bytes=_vmem_limit_bytes(tb, D, itemsize, vmem),
        ),
    )(anchor, positive, negative)

    # Masked tail rows are zero; slice to the true batch and reduce (tiny op).
    total = jnp.sum(losses[:B, 0])
    return total / jnp.float32(B) if size_average else total


def triplet_loss_ref(anchor, positive, negative, *, margin,
                     size_average=True):
    """Pure-JAX reference, mirrors the PyTorch module exactly."""
    a = anchor.astype(jnp.float32)
    p = positive.astype(jnp.float32)
    n = negative.astype(jnp.float32)
    dp = jnp.sum((a - p) ** 2, axis=1)
    dn = jnp.sum((a - n) ** 2, axis=1)
    losses = jnp.maximum(dp - dn + margin, 0.0)
    return jnp.mean(losses) if size_average else jnp.sum(losses)


# ---------------------------------------------------------------------------
# Self-test
# ---------------------------------------------------------------------------

if __name__ == "__main__":
    key = jax.random.PRNGKey(0)
    margin = 1.0

    def make(b, d, dtype=jnp.float32):
        ka, kp, kn = jax.random.split(jax.random.fold_in(key, b * 1000 + d), 3)
        a = jax.random.normal(ka, (b, d), dtype=jnp.float32).astype(dtype)
        p = jax.random.normal(kp, (b, d), dtype=jnp.float32).astype(dtype)
        n = jax.random.normal(kn, (b, d), dtype=jnp.float32).astype(dtype)
        return a, p, n

    # 1) basic f32, mean and sum paths
    a, p, n = make(16, 128)
    out = jax.block_until_ready(triplet_loss(a, p, n, margin=margin))
    ref = triplet_loss_ref(a, p, n, margin=margin)
    assert jnp.allclose(out, ref, rtol=1e-5, atol=1e-5), (out, ref)

    out_s = jax.block_until_ready(
        triplet_loss(a, p, n, margin=margin, size_average=False))
    ref_s = triplet_loss_ref(a, p, n, margin=margin, size_average=False)
    assert jnp.allclose(out_s, ref_s, rtol=1e-5, atol=1e-5), (out_s, ref_s)

    # 2) ragged batch (B not a multiple of 8 / the tile) -> in-kernel masking
    a, p, n = make(19, 128)
    out = jax.block_until_ready(triplet_loss(a, p, n, margin=margin))
    ref = triplet_loss_ref(a, p, n, margin=margin)
    assert jnp.allclose(out, ref, rtol=1e-5, atol=1e-5), (out, ref)

    # 3) wide feature dim -> chunked lane reduction path
    a, p, n = make(16, 256)
    out = jax.block_until_ready(triplet_loss(a, p, n, margin=margin))
    ref = triplet_loss_ref(a, p, n, margin=margin)
    assert jnp.allclose(out, ref, rtol=1e-5, atol=1e-5), (out, ref)

    # 4) bf16 inputs (kernel upcasts; compare vs f32 ref on bf16-rounded data)
    a, p, n = make(16, 128, dtype=jnp.bfloat16)
    out = jax.block_until_ready(triplet_loss(a, p, n, margin=margin))
    ref = triplet_loss_ref(a, p, n, margin=margin)
    assert jnp.allclose(out, ref, rtol=1e-5, atol=1e-5), (out, ref)

    print("KERNEL_OK")
</pallas_src>

<mosaic_0001>
module attributes {stable_mosaic.version = 11 : i64} {
  func.func @_triplet_kernel(%arg0: i32, %arg1: memref<16x128xf32, #tpu.memory_space<vmem>>, %arg2: memref<16x128xf32, #tpu.memory_space<vmem>>, %arg3: memref<16x128xf32, #tpu.memory_space<vmem>>, %arg4: memref<16x1xf32, #tpu.memory_space<vmem>>) attributes {dimension_semantics = [#tpu.dimension_semantics<parallel>], iteration_bounds = array<i64: 1>, scalar_prefetch = 0 : i64, scratch_operands = 0 : i64, tpu.core_type = #tpu.core_type<tc>, window_params = [{transform_indices = @transform_0, window_bounds = array<i64: 16, 128>}, {transform_indices = @transform_1, window_bounds = array<i64: 16, 128>}, {transform_indices = @transform_2, window_bounds = array<i64: 16, 128>}, {transform_indices = @transform_3, window_bounds = array<i64: 16, 1>}]} {
    %c0 = arith.constant 0 : index
    %c0_0 = arith.constant 0 : index
    %0 = vector.load %arg1[%c0, %c0_0] : memref<16x128xf32, #tpu.memory_space<vmem>>, vector<16x128xf32>
    %c0_1 = arith.constant 0 : index
    %c0_2 = arith.constant 0 : index
    %1 = vector.load %arg2[%c0_1, %c0_2] : memref<16x128xf32, #tpu.memory_space<vmem>>, vector<16x128xf32>
    %2 = arith.subf %0, %1 : vector<16x128xf32>
    %3 = arith.mulf %2, %2 : vector<16x128xf32>
    %cst = arith.constant dense<0.000000e+00> : vector<16xf32>
    %4 = vector.multi_reduction <add>, %3, %cst [1] : vector<16x128xf32> to vector<16xf32>
    %5 = vector.shape_cast %4 : vector<16xf32> to vector<16x1xf32>
    %c0_3 = arith.constant 0 : index
    %c0_4 = arith.constant 0 : index
    %6 = vector.load %arg1[%c0_3, %c0_4] : memref<16x128xf32, #tpu.memory_space<vmem>>, vector<16x128xf32>
    %c0_5 = arith.constant 0 : index
    %c0_6 = arith.constant 0 : index
    %7 = vector.load %arg3[%c0_5, %c0_6] : memref<16x128xf32, #tpu.memory_space<vmem>>, vector<16x128xf32>
    %8 = arith.subf %6, %7 : vector<16x128xf32>
    %9 = arith.mulf %8, %8 : vector<16x128xf32>
    %cst_7 = arith.constant dense<0.000000e+00> : vector<16xf32>
    %10 = vector.multi_reduction <add>, %9, %cst_7 [1] : vector<16x128xf32> to vector<16xf32>
    %11 = vector.shape_cast %10 : vector<16xf32> to vector<16x1xf32>
    %12 = arith.subf %5, %11 : vector<16x1xf32>
    %cst_8 = arith.constant 1.000000e+00 : f32
    %13 = vector.broadcast %cst_8 : f32 to vector<16x1xf32>
    %14 = arith.addf %12, %13 : vector<16x1xf32>
    %cst_9 = arith.constant 0.000000e+00 : f32
    %15 = vector.broadcast %cst_9 : f32 to vector<16x1xf32>
    %16 = arith.maximumf %14, %15 : vector<16x1xf32>
    %c16_i32 = arith.constant 16 : i32
    %17 = arith.muli %arg0, %c16_i32 : i32
    %18 = tpu.iota {dimensions = array<i32: 0>} : vector<16x1xi32>
    %19 = vector.broadcast %17 : i32 to vector<16x1xi32>
    %20 = arith.addi %19, %18 : vector<16x1xi32>
    %c16_i32_10 = arith.constant 16 : i32
    %21 = vector.broadcast %c16_i32_10 : i32 to vector<16x1xi32>
    %22 = arith.cmpi slt, %20, %21 : vector<16x1xi32>
    %cst_11 = arith.constant 0.000000e+00 : f32
    %23 = vector.broadcast %cst_11 : f32 to vector<16x1xf32>
    %24 = arith.select %22, %16, %23 : vector<16x1xi1>, vector<16x1xf32>
    %c0_12 = arith.constant 0 : index
    %c0_13 = arith.constant 0 : index
    %25 = vector.load %arg4[%c0_12, %c0_13] : memref<16x1xf32, #tpu.memory_space<vmem>>, vector<16x1xf32>
    tpu.vector_store %arg4[%c0_12, %c0_13], %24 {strides = array<i32>} : memref<16x1xf32, #tpu.memory_space<vmem>>, vector<16x1xf32>,
    return
  }
  func.func @transform_0(%arg0: i32) -> (i32, i32) {
    %c0_i32 = arith.constant 0 : i32
    %c0_i32_0 = arith.constant 0 : i32
    return %arg0, %c0_i32 : i32, i32
  }
  func.func @transform_1(%arg0: i32) -> (i32, i32) {
    %c0_i32 = arith.constant 0 : i32
    %c0_i32_0 = arith.constant 0 : i32
    return %arg0, %c0_i32 : i32, i32
  }
  func.func @transform_2(%arg0: i32) -> (i32, i32) {
    %c0_i32 = arith.constant 0 : i32
    %c0_i32_0 = arith.constant 0 : i32
    return %arg0, %c0_i32 : i32, i32
  }
  func.func @transform_3(%arg0: i32) -> (i32, i32) {
    %c0_i32 = arith.constant 0 : i32
    %c0_i32_0 = arith.constant 0 : i32
    return %arg0, %c0_i32 : i32, i32
  }
}

</mosaic_0001>

<llo_original>
// kernel: tpu_custom_call.1
$region0: #{tpu_custom_call.1}
  #allocation0 [shape = 'u32[]', space=smem, size = 0x4, offset = 0x4, fixed_abs, tag = 'smem constant byte address 0x4 - core index']
  #allocation1 [shape = 'u32[144,128]{1,0:T(1,128)}', space=vmem, size = 0x12000, scoped, tag = 'internal scratch']
  %s0 = inlined_call_operand.hbm [shape: f32[16,128], index: 0, kind: input, shape index: {}]
  %s1 = inlined_call_operand.hbm [shape: f32[16,128], index: 1, kind: input, shape index: {}]
  %s2 = inlined_call_operand.hbm [shape: f32[16,128], index: 2, kind: input, shape index: {}]
  %s3 = inlined_call_operand.vmem [shape: f32[16,1], index: 3, kind: output, shape index: {}]
  %s4 = sld [smem:[#allocation0]]
  $region34: #{tpu_custom_call.1} parent=0
    _
  %s6 = ssub.s32 1, %s4
  %s7 = scalar_select 0, %s6, %s4
  $region1: #{tpu_custom_call.1} parent=0
    #allocation2 [shape = 'u8[8192]{0}', space=vmem, size = 0x2000, scoped, tag = 'input window, operand 0, single buffered']
    #allocation3 [shape = 's32[1]{0}', space=sflag, size = 0x4, scoped, tag = 'scoped memory for tpu_custom_call.1']
    #allocation4 [shape = 'u8[8192]{0}', space=vmem, size = 0x2000, scoped, tag = 'input window, operand 1, single buffered']
    #allocation5 [shape = 's32[1]{0}', space=sflag, size = 0x4, scoped, tag = 'scoped memory for tpu_custom_call.1']
    #allocation6 [shape = 'u8[8192]{0}', space=vmem, size = 0x2000, scoped, tag = 'input window, operand 2, single buffered']
    %8 = vsyncpa [#allocation3], 0
    %9 = vsyncpa [#allocation5], 0
    // Predicated region
    $region2: #{tpu_custom_call.1} parent=1 // pred_check
      _
    $region3: #{tpu_custom_call.1} parent=1 // pred_check_branch
      %11 = sbr.rel (0) target = $region5
    $region4: #{tpu_custom_call.1} parent=1 // pred_region
      %s13 = ssub.s32 256, 256
      %14 = vsyncadd [#allocation3], %s13
      %s15 = sshll.u32 [#allocation2], 4
      %s16 = int_to_ptr.vmem [resolvable:$true] %s15
      %21 = dma.hbm_to_vmem [thread:$0]  %s0, 256, %s16, [#allocation3], 128, 128, 8
    $region5: #{tpu_custom_call.1} parent=1 // pred_fallthru
      _
    // Predicated region
    $region6: #{tpu_custom_call.1} parent=1 // pred_check
      _
    $region7: #{tpu_custom_call.1} parent=1 // pred_check_branch
      %23 = sbr.rel (0) target = $region9
    $region8: #{tpu_custom_call.1} parent=1 // pred_region
      %s25 = ssub.s32 256, 256
      %26 = vsyncadd [#allocation5], %s25
      %s27 = sshll.u32 [#allocation4], 4
      %s28 = int_to_ptr.vmem [resolvable:$true] %s27
      %33 = dma.hbm_to_vmem [thread:$0]  %s1, 256, %s28, [#allocation5], 128, 128, 8
    $region9: #{tpu_custom_call.1} parent=1 // pred_fallthru
      _
    // Predicated region
    $region10: #{tpu_custom_call.1} parent=1 // pred_check
      _
    $region11: #{tpu_custom_call.1} parent=1 // pred_check_branch
      %35 = sbr.rel (0) target = $region13
    $region12: #{tpu_custom_call.1} parent=1 // pred_region
      %s37 = ssub.s32 256, 256
      %38 = vsyncadd [#allocation5], %s37
      %s39 = sshll.u32 [#allocation6], 4
      %s40 = int_to_ptr.vmem [resolvable:$true] %s39
      %45 = dma.hbm_to_vmem [thread:$0]  %s2, 256, %s40, [#allocation5], 128, 128, 8
    $region13: #{tpu_custom_call.1} parent=1 // pred_fallthru
      _
    // Predicated region
    $region14: #{tpu_custom_call.1} parent=1 // pred_check
      _
    $region15: #{tpu_custom_call.1} parent=1 // pred_check_branch
      %47 = sbr.rel (0) target = $region17
    $region16: #{tpu_custom_call.1} parent=1 // pred_region
      %48 = dma.done [#allocation3], 256
    $region17: #{tpu_custom_call.1} parent=1 // pred_fallthru
      _
    // Predicated region
    $region18: #{tpu_custom_call.1} parent=1 // pred_check
      _
    $region19: #{tpu_custom_call.1} parent=1 // pred_check_branch
      %50 = sbr.rel (0) target = $region21
    $region20: #{tpu_custom_call.1} parent=1 // pred_region
      %51 = dma.done [#allocation5], 256
    $region21: #{tpu_custom_call.1} parent=1 // pred_fallthru
      _
    // Predicated region
    $region22: #{tpu_custom_call.1} parent=1 // pred_check
      _
    $region23: #{tpu_custom_call.1} parent=1 // pred_check_branch
      %53 = sbr.rel (0) target = $region25
    $region24: #{tpu_custom_call.1} parent=1 // pred_region
      %54 = dma.done [#allocation5], 256
    $region25: #{tpu_custom_call.1} parent=1 // pred_fallthru
      _
    %v55 = vld [vmem:[#allocation2] sm:$0xff]
    %v56 = vld [vmem:[#allocation2 + $0x8] sm:$0xff]
    %v57 = vld [vmem:[#allocation4] sm:$0xff]
    %v58 = vld [vmem:[#allocation4 + $0x8] sm:$0xff]
    %v59 = vsub.f32 %v55, %v57
    %v60 = vsub.f32 %v56, %v58
    %v61 = vmul.f32 %v59, %v59
    %v62 = vmul.f32 %v60, %v60
    %63 = vadd.xlane.f32.xlu0 %v61
    %v64 = vpop.xlane.xlu0 %63
    %65 = vadd.xlane.f32.xlu0 %v62
    %v66 = vpop.xlane.xlu0 %65
    %v67 = vld [vmem:[#allocation6] sm:$0xff]
    %v68 = vld [vmem:[#allocation6 + $0x8] sm:$0xff]
    %v69 = vsub.f32 %v55, %v67
    %v70 = vsub.f32 %v56, %v68
    %v71 = vmul.f32 %v69, %v69
    %v72 = vmul.f32 %v70, %v70
    %73 = vadd.xlane.f32.xlu0 %v71
    %v74 = vpop.xlane.xlu0 %73
    %75 = vadd.xlane.f32.xlu0 %v72
    %v76 = vpop.xlane.xlu0 %75
    %v77 = vsub.f32 %v64, %v74
    %v78 = vsub.f32 %v66, %v76
    %v79 = vadd.f32 %v77, 1.0
    %v80 = vadd.f32 %v78, 1.0
    %v81 = vmax.f32 %v79, 0.0
    %v82 = vmax.f32 %v80, 0.0
    %s83 = smul.u32 0, 16
    %v84 = vlaneseq
    %v85 = vshrl.u32 %v84, 7
    %v86 = vadd.s32 %v85, 8
    %v87 = vstv %s83
    %v88 = vadd.s32 %v87, %v85
    %v89 = vadd.s32 %v87, %v86
    %vm90 = vcmp.lt.s32.totalorder %v88, 16
    %vm91 = vcmp.lt.s32.totalorder %v89, 16
    %v92 = vsel %vm90, %v81, 0.0
    %v93 = vsel %vm91, %v82, 0.0
    %vm94 = vcmask 7168
    %95 = vst.msk [vmem:[%s3] sm:$0xff] %vm94, %v92
    %96 = vst.msk [vmem:[%s3 + $0x8] sm:$0xff] %vm94, %v93
    // Predicated region
    $region26: #{tpu_custom_call.1} parent=1 // pred_check
      _
    $region27: #{tpu_custom_call.1} parent=1 // pred_check_branch
      %98 = sbr.rel (0) target = $region29
    $region28: #{tpu_custom_call.1} parent=1 // pred_region
      _
    $region29: #{tpu_custom_call.1} parent=1 // pred_fallthru
      _
    // Predicated region
    $region30: #{tpu_custom_call.1} parent=1 // pred_check
      _
    $region31: #{tpu_custom_call.1} parent=1 // pred_check_branch
      %100 = sbr.rel (0) target = $region33
    $region32: #{tpu_custom_call.1} parent=1 // pred_region
      _
    $region33: #{tpu_custom_call.1} parent=1 // pred_fallthru
      _
    %101 = vsyncpa [#allocation3], 1
    %102 = vsyncpa [#allocation5], 1

</llo_original>
